<compile_context>
chip_gen: v6e
topology: v6e:2x2x1
jax: 0.10.0
libtpu: 0.0.40
codegen_flags: <defaults>
</compile_context>

<pallas_src>
import functools
import math

import jax
import jax.numpy as jnp
from jax import lax
from jax.experimental import pallas as pl
from jax.experimental.pallas import tpu as pltpu

# --- deterministic "module parameters" (from __init__ of the synthetic setup) ---
STRIKE = 1.0          # EuropeanOption strike
COST = 1e-5           # BrownianStock(cost=1e-5) -> RelativeCostFunction.cost
RISK_AVERSION = 1.0   # a

_INV_SQRT2 = 0.7071067811865476
_INV_SQRT_2PI = 0.3989422804014327

LANES = 128
TILE_ROWS = 2048      # (4+1) planes * 2048*128*4B * 2 buffers = 10 MiB VMEM


def _round_up(n, m):
    return -(-n // m) * m


def _ncdf(x):
    return 0.5 * (1.0 + lax.erf(x * _INV_SQRT2))


def _npdf(x):
    return jnp.exp(-0.5 * x * x) * _INV_SQRT_2PI


def _ww_kernel(x_ref, out_ref, *, log_const):
    """x_ref: (4, tile_r, 128) f32 planes [s, t, v, prev]; out_ref: (tile_r, 128)."""
    s = x_ref[0]                         # log moneyness
    t = x_ref[1]                         # time to maturity
    v = x_ref[2]                         # volatility
    prev = x_ref[3]                      # previous hedge ratio

    # u = (v*sqrt(t))^2; one rsqrt replaces sqrt + reciprocal, log(u) == 2*log(vt).
    u = v * v * t
    inv_vt = lax.rsqrt(u)
    d1 = s * inv_vt + 0.5 * (u * inv_vt)
    delta = _ncdf(d1)                    # Black-Scholes call delta (r = 0)

    # Band half-width in log space:
    #   arg = 3c * gamma^2 * spot / (2a)
    #       = [3c / (4*pi*a*strike)] * exp(-d1^2 - s) / vt^2
    #   width = arg ** (1/3) = exp((log_const - d1^2 - s - log(u)) / 3)
    log_arg = log_const - d1 * d1 - s - jnp.log(u)
    width = jnp.exp(log_arg * (1.0 / 3.0))

    # lo <= hi always (width >= 0) -> min/max clamp is identical to the
    # below/above/in_interval select chain of the reference module.
    out_ref[...] = jnp.clip(prev, delta - width, delta + width)


def whalley_wilmott(x, *, cost=COST, a=RISK_AVERSION, strike=STRIKE,
                    tile_rows=TILE_ROWS):
    """x: (N, *, 4) float32 -> (N, *, 1) float32."""
    x = jnp.asarray(x, jnp.float32)
    lead = x.shape[:-1]
    h_in = x.shape[-1]
    assert h_in == 4, "expects [log_moneyness, time_to_maturity, volatility, prev_hedge]"

    x2 = x.reshape(-1, h_in)             # glue: flatten leading dims
    m = x2.shape[0]

    # Minimal lane-dense padding: rows is a multiple of 8, no rounding to tiles.
    rows = max(8, _round_up(-(-m // LANES), 8))
    padded = rows * LANES
    pad_n = padded - m

    # Tile: multiple of 8, >= 2 grid steps when there is enough work (v7x
    # megacore), bounded so double-buffered blocks stay ~10 MiB of VMEM.
    tile_r = min(tile_rows, rows)
    if rows > 8:
        tile_r = min(tile_r, _round_up(-(-rows // 2), 8))
    grid = -(-rows // tile_r)            # last block may be partial (masked)

    # Single pad + reshape + transpose -> one XLA relayout pass.
    # Fill value 1.0 (t = v = 1) keeps all padded-row math finite.
    if pad_n:
        x2 = jnp.pad(x2, ((0, pad_n), (0, 0)), constant_values=1.0)
    x_planes = jnp.transpose(x2.reshape(rows, LANES, h_in), (2, 0, 1))  # (4,rows,128)

    # Constant part of log(arg); cost == 0 -> width == 0 (exp(-inf)), i.e. the
    # reference clamp-to-delta (no-cost) behavior.
    if cost > 0.0:
        log_const = math.log(3.0 * cost / (4.0 * math.pi * a * strike))
    else:
        log_const = float("-inf")

    kernel = functools.partial(_ww_kernel, log_const=log_const)

    out = pl.pallas_call(
        kernel,
        out_shape=jax.ShapeDtypeStruct((rows, LANES), jnp.float32),
        grid=(grid,),
        in_specs=[pl.BlockSpec((h_in, tile_r, LANES), lambda i: (0, i, 0))],
        out_specs=pl.BlockSpec((tile_r, LANES), lambda i: (i, 0)),
        compiler_params=pltpu.CompilerParams(
            dimension_semantics=("parallel",)),
    )(x_planes)

    flat = out.reshape(-1)
    if pad_n:
        # TODO(synk): unavoidable 8 B/elem tail copy while the consumer needs
        # (N, *, 1); exposing the (rows, 128) plane would remove it.
        flat = flat[:m]
    return flat.reshape(*lead, 1)


def _reference(x, *, cost=COST, a=RISK_AVERSION, strike=STRIKE):
    """Pure-JAX reference of the same forward pass (original formulation)."""
    x = jnp.asarray(x, jnp.float32)
    s, t, v, prev = (x[..., i:i + 1] for i in range(4))
    vt = v * jnp.sqrt(t)
    d1 = s / vt + 0.5 * vt
    delta = _ncdf(d1)
    spot = strike * jnp.exp(s)
    gamma = _npdf(d1) / (spot * vt)
    width = jnp.power(3.0 * cost * gamma ** 2 * spot / (2.0 * a), 1.0 / 3.0)
    return jnp.clip(prev, delta - width, delta + width)


def _make_inputs(key, shape):
    k1, k2, k3, k4 = jax.random.split(key, 4)
    log_moneyness = jax.random.uniform(k1, shape + (1,), minval=-0.10, maxval=0.10)
    time_to_mat = jax.random.uniform(k2, shape + (1,), minval=0.05, maxval=0.50)
    volatility = jax.random.uniform(k3, shape + (1,), minval=0.15, maxval=0.30)
    prev_hedge = jax.random.uniform(k4, shape + (1,), minval=0.0, maxval=1.0)
    return jnp.concatenate(
        [log_moneyness, time_to_mat, volatility, prev_hedge], axis=-1
    ).astype(jnp.float32)


if __name__ == "__main__":
    key = jax.random.PRNGKey(0)
    k_small, k_big, k_rag = jax.random.split(key, 3)

    # Small shape consistent with the module: (N, *, H_in) = (2, 8, 4).
    x_small = _make_inputs(k_small, (2, 8))
    out_small = jax.block_until_ready(whalley_wilmott(x_small))
    ref_small = _reference(x_small)
    assert out_small.shape == (2, 8, 1), out_small.shape
    assert jnp.allclose(out_small, ref_small, atol=1e-5, rtol=1e-5)

    # No-cost limit (second docstring example): width == 0 -> clamp to delta.
    out_free = jax.block_until_ready(whalley_wilmott(x_small, cost=0.0))
    ref_free = _reference(x_small, cost=0.0)
    assert jnp.allclose(out_free, ref_free, atol=1e-5, rtol=1e-5)

    # Multi-block pipelined grid (2 even steps -> megacore-splittable) + padding.
    x_big = _make_inputs(k_big, (3, 70000))
    out_big = jax.block_until_ready(whalley_wilmott(x_big))
    ref_big = _reference(x_big)
    assert out_big.shape == (3, 70000, 1), out_big.shape
    assert jnp.allclose(out_big, ref_big, atol=1e-5, rtol=1e-5)

    # Ragged final block (rows not a multiple of tile_r) exercises OOB masking.
    x_rag = _make_inputs(k_rag, (5, 50000))
    out_rag = jax.block_until_ready(whalley_wilmott(x_rag))
    ref_rag = _reference(x_rag)
    assert out_rag.shape == (5, 50000, 1), out_rag.shape
    assert jnp.allclose(out_rag, ref_rag, atol=1e-5, rtol=1e-5)

    print("KERNEL_OK")
</pallas_src>

<mosaic_0001>
module attributes {stable_mosaic.version = 11 : i64} {
  func.func @_ww_kernel(%arg0: i32, %arg1: memref<4x8x128xf32, #tpu.memory_space<vmem>>, %arg2: memref<8x128xf32, #tpu.memory_space<vmem>>) attributes {dimension_semantics = [#tpu.dimension_semantics<parallel>], iteration_bounds = array<i64: 1>, scalar_prefetch = 0 : i64, scratch_operands = 0 : i64, tpu.core_type = #tpu.core_type<tc>, window_params = [{transform_indices = @transform_0, window_bounds = array<i64: 4, 8, 128>}, {transform_indices = @transform_1, window_bounds = array<i64: 8, 128>}]} {
    %c0 = arith.constant 0 : index
    %c0_0 = arith.constant 0 : index
    %c0_1 = arith.constant 0 : index
    %0 = vector.load %arg1[%c0, %c0_0, %c0_1] : memref<4x8x128xf32, #tpu.memory_space<vmem>>, vector<1x8x128xf32>
    %1 = vector.shape_cast %0 : vector<1x8x128xf32> to vector<8x128xf32>
    %c1 = arith.constant 1 : index
    %c0_2 = arith.constant 0 : index
    %c0_3 = arith.constant 0 : index
    %2 = vector.load %arg1[%c1, %c0_2, %c0_3] : memref<4x8x128xf32, #tpu.memory_space<vmem>>, vector<1x8x128xf32>
    %3 = vector.shape_cast %2 : vector<1x8x128xf32> to vector<8x128xf32>
    %c2 = arith.constant 2 : index
    %c0_4 = arith.constant 0 : index
    %c0_5 = arith.constant 0 : index
    %4 = vector.load %arg1[%c2, %c0_4, %c0_5] : memref<4x8x128xf32, #tpu.memory_space<vmem>>, vector<1x8x128xf32>
    %5 = vector.shape_cast %4 : vector<1x8x128xf32> to vector<8x128xf32>
    %c3 = arith.constant 3 : index
    %c0_6 = arith.constant 0 : index
    %c0_7 = arith.constant 0 : index
    %6 = vector.load %arg1[%c3, %c0_6, %c0_7] : memref<4x8x128xf32, #tpu.memory_space<vmem>>, vector<1x8x128xf32>
    %7 = vector.shape_cast %6 : vector<1x8x128xf32> to vector<8x128xf32>
    %8 = arith.mulf %5, %5 : vector<8x128xf32>
    %9 = arith.mulf %8, %3 : vector<8x128xf32>
    %10 = math.rsqrt %9 : vector<8x128xf32>
    %11 = arith.mulf %1, %10 : vector<8x128xf32>
    %12 = arith.mulf %9, %10 : vector<8x128xf32>
    %cst = arith.constant 5.000000e-01 : f32
    %13 = vector.broadcast %cst : f32 to vector<8x128xf32>
    %14 = arith.mulf %13, %12 : vector<8x128xf32>
    %15 = arith.addf %11, %14 : vector<8x128xf32>
    %cst_8 = arith.constant 0.707106769 : f32
    %16 = vector.broadcast %cst_8 : f32 to vector<8x128xf32>
    %17 = arith.mulf %15, %16 : vector<8x128xf32>
    %18 = math.erf %17 : vector<8x128xf32>
    %cst_9 = arith.constant 1.000000e+00 : f32
    %19 = vector.broadcast %cst_9 : f32 to vector<8x128xf32>
    %20 = arith.addf %19, %18 : vector<8x128xf32>
    %cst_10 = arith.constant 5.000000e-01 : f32
    %21 = vector.broadcast %cst_10 : f32 to vector<8x128xf32>
    %22 = arith.mulf %21, %20 : vector<8x128xf32>
    %23 = arith.mulf %15, %15 : vector<8x128xf32>
    %cst_11 = arith.constant -12.9453373 : f32
    %24 = vector.broadcast %cst_11 : f32 to vector<8x128xf32>
    %25 = arith.subf %24, %23 : vector<8x128xf32>
    %26 = arith.subf %25, %1 : vector<8x128xf32>
    %27 = math.log %9 : vector<8x128xf32>
    %28 = arith.subf %26, %27 : vector<8x128xf32>
    %cst_12 = arith.constant 0.333333343 : f32
    %29 = vector.broadcast %cst_12 : f32 to vector<8x128xf32>
    %30 = arith.mulf %28, %29 : vector<8x128xf32>
    %31 = math.exp %30 : vector<8x128xf32>
    %32 = arith.subf %22, %31 : vector<8x128xf32>
    %33 = arith.addf %22, %31 : vector<8x128xf32>
    %34 = arith.maximumf %32, %7 : vector<8x128xf32>
    %35 = arith.minimumf %33, %34 : vector<8x128xf32>
    %c0_13 = arith.constant 0 : index
    %c0_14 = arith.constant 0 : index
    %36 = vector.load %arg2[%c0_13, %c0_14] : memref<8x128xf32, #tpu.memory_space<vmem>>, vector<8x128xf32>
    tpu.vector_store %arg2[%c0_13, %c0_14], %35 {strides = array<i32>} : memref<8x128xf32, #tpu.memory_space<vmem>>, vector<8x128xf32>,
    return
  }
  func.func @transform_0(%arg0: i32) -> (i32, i32, i32) {
    %c0_i32 = arith.constant 0 : i32
    %c0_i32_0 = arith.constant 0 : i32
    %c0_i32_1 = arith.constant 0 : i32
    return %c0_i32, %arg0, %c0_i32_0 : i32, i32, i32
  }
  func.func @transform_1(%arg0: i32) -> (i32, i32) {
    %c0_i32 = arith.constant 0 : i32
    %c0_i32_0 = arith.constant 0 : i32
    return %arg0, %c0_i32 : i32, i32
  }
}

</mosaic_0001>

<llo_original>
// kernel: tpu_custom_call.1
$region0: #{tpu_custom_call.1}
  #allocation0 [shape = 'u32[]', space=smem, size = 0x4, offset = 0x4, fixed_abs, tag = 'smem constant byte address 0x4 - core index']
  #allocation1 [shape = 'u32[144,128]{1,0:T(1,128)}', space=vmem, size = 0x12000, scoped, tag = 'internal scratch']
  %s0 = inlined_call_operand.hbm [shape: f32[4,8,128], index: 0, kind: input, shape index: {}]
  %s1 = inlined_call_operand.hbm [shape: f32[8,128], index: 1, kind: output, shape index: {}]
  %s2 = sld [smem:[#allocation0]]
  $region18: #{tpu_custom_call.1} parent=0
    _
  %s4 = ssub.s32 1, %s2
  %s5 = scalar_select 0, %s4, %s2
  $region1: #{tpu_custom_call.1} parent=0
    #allocation2 [shape = 'u8[16384]{0}', space=vmem, size = 0x4000, scoped, tag = 'input window, operand 0, single buffered']
    #allocation3 [shape = 's32[1]{0}', space=sflag, size = 0x4, scoped, tag = 'scoped memory for tpu_custom_call.1']
    #allocation4 [shape = 's32[1]{0}', space=sflag, size = 0x4, scoped, tag = 'scoped memory for tpu_custom_call.1']
    #allocation5 [shape = 'u8[4096]{0}', space=vmem, size = 0x1000, scoped, tag = 'output window, operand 0, single buffered']
    %6 = vsyncpa [#allocation3], 0
    %7 = vsyncpa [#allocation4], 0
    // Predicated region
    $region2: #{tpu_custom_call.1} parent=1 // pred_check
      _
    $region3: #{tpu_custom_call.1} parent=1 // pred_check_branch
      %9 = sbr.rel (0) target = $region5
    $region4: #{tpu_custom_call.1} parent=1 // pred_region
      %s11 = ssub.s32 512, 512
      %12 = vsyncadd [#allocation3], %s11
      %s13 = sshll.u32 [#allocation2], 4
      %s14 = int_to_ptr.vmem [resolvable:$true] %s13
      %19 = dma.hbm_to_vmem [thread:$0]  %s0, 512, %s14, [#allocation3], 128, 128, 8
    $region5: #{tpu_custom_call.1} parent=1 // pred_fallthru
      _
    // Predicated region
    $region6: #{tpu_custom_call.1} parent=1 // pred_check
      _
    $region7: #{tpu_custom_call.1} parent=1 // pred_check_branch
      %21 = sbr.rel (0) target = $region9
    $region8: #{tpu_custom_call.1} parent=1 // pred_region
      %22 = dma.done [#allocation3], 512
    $region9: #{tpu_custom_call.1} parent=1 // pred_fallthru
      _
    %v23 = vld [vmem:[#allocation2] sm:$0xff]
    %s24 = scalar_lea.vmem [#allocation2], 8
    %v25 = vld [vmem:[%s24] sm:$0xff]
    %s26 = scalar_lea.vmem [#allocation2], 16
    %v27 = vld [vmem:[%s26] sm:$0xff]
    %s28 = scalar_lea.vmem [#allocation2], 24
    %v29 = vld [vmem:[%s28] sm:$0xff]
    %v30 = vmul.f32 %v27, %v27
    %v31 = vmul.f32 %v30, %v25
    %v32 = vrsqrt.pop %v31
    %v33 = vmul.f32 %v23, %v32
    %v34 = vmul.f32 %v31, %v32
    %v35 = vmul.f32 %v34, 0.5
    %v36 = vadd.f32 %v33, %v35
    %v37 = vmul.f32 %v36, 0.70710677
    %v38 = verf.f32.pop %v37
    %v39 = vadd.f32 %v38, 1.0
    %v40 = vmul.f32 %v39, 0.5
    %v41 = vmul.f32 %v36, %v36
    %v42 = vsub.f32 -12.945337, %v41
    %v43 = vsub.f32 %v42, %v23
    %v44 = vlog2.pop %v31
    %v45 = vmul.f32 %v44, 0.6931472
    %v46 = vsub.f32 %v43, %v45
    %v47 = vmul.f32 %v46, 0.33333334
    %v48 = vmul.f32 %v47, 1.442695
    %v49 = vpow.pop %v48
    %v50 = vsub.f32 %v40, %v49
    %v51 = vadd.f32 %v40, %v49
    %v52 = vmax.f32 %v50, %v29
    %v53 = vmin.f32 %v51, %v52
    %54 = vst [vmem:[#allocation5] sm:$0xff] %v53
    // Predicated region
    $region10: #{tpu_custom_call.1} parent=1 // pred_check
      _
    $region11: #{tpu_custom_call.1} parent=1 // pred_check_branch
      %56 = sbr.rel (0) target = $region13
    $region12: #{tpu_custom_call.1} parent=1 // pred_region
      %s58 = ssub.s32 128, 128
      %59 = vsyncadd [#allocation4], %s58
      %s61 = sshll.u32 [#allocation5], 4
      %s62 = int_to_ptr.vmem [resolvable:$true] %s61
      %64 = dma.vmem_to_hbm [thread:$0]  %s62, 128, %s1, [#allocation4]
    $region13: #{tpu_custom_call.1} parent=1 // pred_fallthru
      _
    // Predicated region
    $region14: #{tpu_custom_call.1} parent=1 // pred_check
      _
    $region15: #{tpu_custom_call.1} parent=1 // pred_check_branch
      %66 = sbr.rel (0) target = $region17
    $region16: #{tpu_custom_call.1} parent=1 // pred_region
      %67 = dma.done [#allocation4], 128
    $region17: #{tpu_custom_call.1} parent=1 // pred_fallthru
      _
    %68 = vsyncpa [#allocation3], 1
    %69 = vsyncpa [#allocation4], 1

</llo_original>
